<compile_context>
chip_gen: v7x
topology: tpu7x:2x2x1
jax: 0.10.0
libtpu: 0.0.40
codegen_flags: <defaults>
</compile_context>

<pallas_src>
import jax
import jax.numpy as jnp
from jax.experimental import pallas as pl
from jax.experimental.pallas import tpu as pltpu


def _round_up(x: int, m: int) -> int:
    return ((x + m - 1) // m) * m


def _dot_product_kernel(clicked_ref, cand_ref, out_ref):
    # clicked_ref: (TB, D), cand_ref: (TB, D, N), out_ref: (TB, N)
    u = clicked_ref[...].astype(jnp.float32)          # (TB, D)
    c = cand_ref[...].astype(jnp.float32)             # (TB, D, N)
    # VPU broadcast-multiply + reduce over D (no MXU M=1 matmuls).
    scores = jnp.sum(u[:, :, None] * c, axis=1)       # (TB, N), f32 accumulate
    out_ref[...] = scores.astype(out_ref.dtype)


def _choose_tiling(B: int, D: int, N: int, itemsize: int, block_b=None):
    """Pick the batch block size TB and the scoped-VMEM limit."""
    try:
        vmem_cap = pltpu.get_tpu_info().vmem_capacity_bytes
    except Exception:
        vmem_cap = 64 * 1024 * 1024  # conservative (v7x-sized) fallback
    # Use ~3/4 of physical VMEM, never more than 96 MiB (v5e/v6e: 96 MiB of
    # 128 MiB; v7x: 48 MiB of 64 MiB).
    vmem_limit = int(min((vmem_cap * 3) // 4, 96 * 1024 * 1024))

    if block_b is not None:
        return max(8, _round_up(int(block_b), 8)), vmem_limit

    # VMEM footprint of one batch row of the candidate block, counting the
    # (8,128) tile padding of the trailing (D, N) dims.
    cand_row_bytes = _round_up(D, 8) * _round_up(N, 128) * itemsize
    # Candidate double-buffer gets at most half the scoped VMEM budget.
    tb = (vmem_limit // 2) // (2 * cand_row_bytes)
    tb = max(8, min(1024, (tb // 8) * 8))
    # Keep several grid steps alive (megacore sharding / pipelining) when the
    # batch is large enough to allow it.
    if B >= 64:
        tb = min(tb, max(8, _round_up(pl.cdiv(B, 8), 8)))
    return tb, vmem_limit


def dot_product(clicked_news_vector: jax.Array,
                candidate_news_vector: jax.Array,
                *, block_b=None) -> jax.Array:
    """Pallas equivalent of torch.bmm(clicked, candidate).squeeze(1)."""
    B, one, D = clicked_news_vector.shape
    assert one == 1, "clicked_news_vector must be (B, 1, D)"
    Bc, Dc, N = candidate_news_vector.shape
    assert Bc == B and Dc == D

    out_dtype = jnp.result_type(clicked_news_vector.dtype,
                                candidate_news_vector.dtype)
    itemsize = max(jnp.dtype(clicked_news_vector.dtype).itemsize,
                   jnp.dtype(candidate_news_vector.dtype).itemsize)

    tb, vmem_limit = _choose_tiling(B, D, N, itemsize, block_b)

    clicked2d = jnp.reshape(clicked_news_vector, (B, D))
    cand = candidate_news_vector

    if B <= tb:
        # Whole batch in a single block; block dims equal full array dims.
        tb = B
        b_pad = B
    else:
        b_pad = _round_up(B, tb)
        if b_pad != B:
            clicked2d = jnp.pad(clicked2d, ((0, b_pad - B), (0, 0)))
            cand = jnp.pad(cand, ((0, b_pad - B), (0, 0), (0, 0)))

    grid_b = b_pad // tb

    out = pl.pallas_call(
        _dot_product_kernel,
        out_shape=jax.ShapeDtypeStruct((b_pad, N), out_dtype),
        grid_spec=pltpu.PrefetchScalarGridSpec(
            num_scalar_prefetch=0,
            grid=(grid_b,),
            in_specs=[
                pl.BlockSpec((tb, D), lambda b: (b, 0)),
                pl.BlockSpec((tb, D, N), lambda b: (b, 0, 0)),
            ],
            out_specs=pl.BlockSpec((tb, N), lambda b: (b, 0)),
        ),
        compiler_params=pltpu.CompilerParams(
            dimension_semantics=("parallel",),
            vmem_limit_bytes=vmem_limit,
        ),
    )(clicked2d, cand)

    return out[:B] if b_pad != B else out


if __name__ == "__main__":
    key = jax.random.PRNGKey(0)
    k1, k2, k3, k4 = jax.random.split(key, 4)

    # Test 1: small shapes consistent with the module (single-block path).
    B, D, N = 2, 32, 8
    clicked = jax.random.normal(k1, (B, 1, D), dtype=jnp.float32)
    candidate = jax.random.normal(k2, (B, D, N), dtype=jnp.float32)
    out = jax.block_until_ready(dot_product(clicked, candidate))
    ref = jnp.einsum("bod,bdn->bon", clicked, candidate)[:, 0, :]
    assert out.shape == (B, N)
    assert jnp.allclose(out, ref, atol=1e-5, rtol=1e-5)

    # Test 2: exercise the blocked-batch path with a ragged tail (B % TB != 0).
    B2, D2, N2 = 20, 32, 8
    clicked2 = jax.random.normal(k3, (B2, 1, D2), dtype=jnp.float32)
    candidate2 = jax.random.normal(k4, (B2, D2, N2), dtype=jnp.float32)
    out2 = jax.block_until_ready(dot_product(clicked2, candidate2, block_b=8))
    ref2 = jnp.einsum("bod,bdn->bon", clicked2, candidate2)[:, 0, :]
    assert out2.shape == (B2, N2)
    assert jnp.allclose(out2, ref2, atol=1e-5, rtol=1e-5)

    print("KERNEL_OK")
</pallas_src>

<mosaic_0001>
module attributes {stable_mosaic.version = 11 : i64} {
  func.func @_dot_product_kernel(%arg0: i32, %arg1: memref<2x32xf32, #tpu.memory_space<vmem>>, %arg2: memref<2x32x8xf32, #tpu.memory_space<vmem>>, %arg3: memref<2x8xf32, #tpu.memory_space<vmem>>) attributes {dimension_semantics = [#tpu.dimension_semantics<parallel>], iteration_bounds = array<i64: 1>, scalar_prefetch = 0 : i64, scratch_operands = 0 : i64, tpu.core_type = #tpu.core_type<tc>, window_params = [{transform_indices = @transform_0, window_bounds = array<i64: 2, 32>}, {transform_indices = @transform_1, window_bounds = array<i64: 2, 32, 8>}, {transform_indices = @transform_2, window_bounds = array<i64: 2, 8>}]} {
    %c0 = arith.constant 0 : index
    %c0_0 = arith.constant 0 : index
    %0 = vector.load %arg1[%c0, %c0_0] : memref<2x32xf32, #tpu.memory_space<vmem>>, vector<2x32xf32>
    %c0_1 = arith.constant 0 : index
    %c0_2 = arith.constant 0 : index
    %c0_3 = arith.constant 0 : index
    %1 = vector.load %arg2[%c0_1, %c0_2, %c0_3] : memref<2x32x8xf32, #tpu.memory_space<vmem>>, vector<2x32x8xf32>
    %2 = vector.shape_cast %0 : vector<2x32xf32> to vector<2x32x1xf32>
    %3 = vector.broadcast %2 : vector<2x32x1xf32> to vector<2x32x8xf32>
    %4 = arith.mulf %3, %1 : vector<2x32x8xf32>
    %cst = arith.constant dense<0.000000e+00> : vector<2x8xf32>
    %5 = vector.multi_reduction <add>, %4, %cst [1] : vector<2x32x8xf32> to vector<2x8xf32>
    %c0_4 = arith.constant 0 : index
    %c0_5 = arith.constant 0 : index
    %6 = vector.load %arg3[%c0_4, %c0_5] : memref<2x8xf32, #tpu.memory_space<vmem>>, vector<2x8xf32>
    tpu.vector_store %arg3[%c0_4, %c0_5], %5 {strides = array<i32>} : memref<2x8xf32, #tpu.memory_space<vmem>>, vector<2x8xf32>,
    return
  }
  func.func @transform_0(%arg0: i32) -> (i32, i32) {
    %c0_i32 = arith.constant 0 : i32
    %c0_i32_0 = arith.constant 0 : i32
    return %arg0, %c0_i32 : i32, i32
  }
  func.func @transform_1(%arg0: i32) -> (i32, i32, i32) {
    %c0_i32 = arith.constant 0 : i32
    %c0_i32_0 = arith.constant 0 : i32
    %c0_i32_1 = arith.constant 0 : i32
    return %arg0, %c0_i32, %c0_i32_0 : i32, i32, i32
  }
  func.func @transform_2(%arg0: i32) -> (i32, i32) {
    %c0_i32 = arith.constant 0 : i32
    %c0_i32_0 = arith.constant 0 : i32
    return %arg0, %c0_i32 : i32, i32
  }
}

</mosaic_0001>

<llo_original>
// kernel: tpu_custom_call.1
$region0: #{tpu_custom_call.1}
  #allocation0 [shape = 'u32[]', space=smem, size = 0x4, offset = 0x4, fixed_abs, tag = 'smem constant byte address 0x4 - core index']
  #allocation1 [shape = 'u32[144,128]{1,0:T(1,128)}', space=vmem, size = 0x12000, scoped, tag = 'internal scratch']
  %s0 = inlined_call_operand.vmem [shape: f32[2,32], index: 0, kind: input, shape index: {}]
  %s1 = inlined_call_operand.vmem [shape: f32[2,32,8], index: 1, kind: input, shape index: {}]
  %s2 = inlined_call_operand.hbm [shape: f32[2,8], index: 2, kind: output, shape index: {}]
  %s3 = sld [smem:[#allocation0]]
  $region18: #{tpu_custom_call.1} parent=0
    _
  %s5 = ssub.s32 1, %s3
  %s6 = scalar_select 0, %s5, %s3
  $region1: #{tpu_custom_call.1} parent=0
    #allocation2 [shape = 'u8[1024]{0}', space=vmem, size = 0x400, scoped, tag = 'output window, operand 0, single buffered']
    #allocation3 [shape = 's32[1]{0}', space=sflag, size = 0x4, scoped, tag = 'scoped memory for tpu_custom_call.1']
    %7 = vsyncpa [#allocation3], 0
    // Predicated region
    $region2: #{tpu_custom_call.1} parent=1 // pred_check
      _
    $region3: #{tpu_custom_call.1} parent=1 // pred_check_branch
      %9 = sbr.rel (0) target = $region5
    $region4: #{tpu_custom_call.1} parent=1 // pred_region
      _
    $region5: #{tpu_custom_call.1} parent=1 // pred_fallthru
      _
    // Predicated region
    $region6: #{tpu_custom_call.1} parent=1 // pred_check
      _
    $region7: #{tpu_custom_call.1} parent=1 // pred_check_branch
      %11 = sbr.rel (0) target = $region9
    $region8: #{tpu_custom_call.1} parent=1 // pred_region
      _
    $region9: #{tpu_custom_call.1} parent=1 // pred_fallthru
      _
    %v12 = vld [vmem:[%s0] sm:$0x3]
    %v13 = vld [vmem:[%s1] sm:$0xff]
    %v14 = vld [vmem:[%s1 + $0x8] sm:$0xff]
    %v15 = vld [vmem:[%s1 + $0x10] sm:$0xff]
    %v16 = vld [vmem:[%s1 + $0x18] sm:$0xff]
    %v17 = vld [vmem:[%s1 + $0x20] sm:$0xff]
    %v18 = vld [vmem:[%s1 + $0x28] sm:$0xff]
    %v19 = vld [vmem:[%s1 + $0x30] sm:$0xff]
    %v20 = vld [vmem:[%s1 + $0x38] sm:$0xff]
    %v21 = vlaneseq
    %v22 = vshrl.u32 %v21, 7
    %v23 = vsub.s32 0, %v22
    %v24 = vrot.slane %v12, %v23
    %26 = vbcast.lane.b32.xlu0 %v24, 256
    %v27 = vpop.permute.xlu0 %26
    %s29 = sor.u32 256, 8
    %30 = vbcast.lane.b32.xlu0 %v24, %s29
    %v31 = vpop.permute.xlu0 %30
    %s33 = sor.u32 256, 16
    %34 = vbcast.lane.b32.xlu0 %v24, %s33
    %v35 = vpop.permute.xlu0 %34
    %s37 = sor.u32 256, 24
    %38 = vbcast.lane.b32.xlu0 %v24, %s37
    %v39 = vpop.permute.xlu0 %38
    %v40 = vlaneseq
    %v41 = vshrl.u32 %v40, 7
    %v42 = vsub.s32 1, %v41
    %v43 = vrot.slane %v12, %v42
    %45 = vbcast.lane.b32.xlu0 %v43, 256
    %v46 = vpop.permute.xlu0 %45
    %s48 = sor.u32 256, 8
    %49 = vbcast.lane.b32.xlu0 %v43, %s48
    %v50 = vpop.permute.xlu0 %49
    %s52 = sor.u32 256, 16
    %53 = vbcast.lane.b32.xlu0 %v43, %s52
    %v54 = vpop.permute.xlu0 %53
    %s56 = sor.u32 256, 24
    %57 = vbcast.lane.b32.xlu0 %v43, %s56
    %v58 = vpop.permute.xlu0 %57
    %v59 = vmul.f32 %v27, %v13
    %v60 = vmul.f32 %v31, %v14
    %v61 = vmul.f32 %v35, %v15
    %v62 = vmul.f32 %v39, %v16
    %v63 = vmul.f32 %v46, %v17
    %v64 = vmul.f32 %v50, %v18
    %v65 = vmul.f32 %v54, %v19
    %v66 = vmul.f32 %v58, %v20
    %vm67 = vcmask 64512
    %v68 = vsel %vm67, %v59, 0.0
    %v69 = vsel %vm67, %v60, 0.0
    %v70 = vadd.f32 %v68, %v69
    %v71 = vsel %vm67, %v61, 0.0
    %v72 = vadd.f32 %v70, %v71
    %v73 = vsel %vm67, %v62, 0.0
    %v74 = vadd.f32 %v72, %v73
    %v75 = vrot.slane %v74, 4
    %v76 = vadd.f32 %v74, %v75
    %v77 = vrot.slane %v76, 2
    %v78 = vadd.f32 %v76, %v77
    %v79 = vrot.slane %v78, 1
    %v80 = vadd.f32 %v78, %v79
    %v81 = vsel %vm67, %v63, 0.0
    %v82 = vsel %vm67, %v64, 0.0
    %v83 = vadd.f32 %v81, %v82
    %v84 = vsel %vm67, %v65, 0.0
    %v85 = vadd.f32 %v83, %v84
    %v86 = vsel %vm67, %v66, 0.0
    %v87 = vadd.f32 %v85, %v86
    %v88 = vrot.slane %v87, 4
    %v89 = vadd.f32 %v87, %v88
    %v90 = vrot.slane %v89, 2
    %v91 = vadd.f32 %v89, %v90
    %v92 = vrot.slane %v91, 1
    %v93 = vadd.f32 %v91, %v92
    %vm96 = vcmask 1041409
    %v97 = vsel %vm96, %v93, %v80
    %vm99 = vcmask 58368
    %100 = vst.msk [vmem:[#allocation2] sm:$0x3] %vm99, %v97
    // Predicated region
    $region10: #{tpu_custom_call.1} parent=1 // pred_check
      _
    $region11: #{tpu_custom_call.1} parent=1 // pred_check_branch
      %102 = sbr.rel (0) target = $region13
    $region12: #{tpu_custom_call.1} parent=1 // pred_region
      %s104 = ssub.s32 32, 32
      %105 = vsyncadd [#allocation3], %s104
      %s107 = sshll.u32 [#allocation2], 4
      %s108 = int_to_ptr.vmem [resolvable:$true] %s107
      %110 = dma.vmem_to_hbm [thread:$0]  %s108, 32, %s2, [#allocation3]
    $region13: #{tpu_custom_call.1} parent=1 // pred_fallthru
      _
    // Predicated region
    $region14: #{tpu_custom_call.1} parent=1 // pred_check
      _
    $region15: #{tpu_custom_call.1} parent=1 // pred_check_branch
      %112 = sbr.rel (0) target = $region17
    $region16: #{tpu_custom_call.1} parent=1 // pred_region
      %113 = dma.done [#allocation3], 32
    $region17: #{tpu_custom_call.1} parent=1 // pred_fallthru
      _
    %114 = vsyncpa [#allocation3], 1

</llo_original>
